<compile_context>
chip_gen: v7x
topology: tpu7x:2x2x1
jax: 0.10.0
libtpu: 0.0.40
codegen_flags: <defaults>
</compile_context>

<pallas_src>
import functools

import jax
import jax.numpy as jnp
from jax.experimental import pallas as pl
from jax.experimental.pallas import tpu as pltpu

LOG_SIG_MAX = 2.0
LOG_SIG_MIN = -9.0

# Largest single-step batch tile on a 1-TensorCore chip.  At these feature
# dims (in<=32, hid=32, 2*act=8) a 16K-row tile is ~1 MiB of double-buffered
# bf16 x, ~1 MiB of f32 output and a few MiB of f32 temporaries — well under
# the 16/32 MiB default scoped-VMEM limits on every generation (and far under
# v7x's 64 MiB physical VMEM), so VMEM never forces smaller tiles here.
_MAX_SINGLE_TILE = 16384
_MULTI_STEP_TILE = 8192


def _round_up(x, m):
    return ((x + m - 1) // m) * m


def _num_tensorcores():
    # v5e / v6e: 1 TensorCore per chip; v7x: 2 TensorCores per chip.
    kind = getattr(jax.devices()[0], "device_kind", "").lower()
    return 2 if "v7" in kind else 1


def _batch_tiling(B):
    """Pick (batch_tile, grid_steps, dimension_semantics)."""
    n_cores = _num_tensorcores()
    if n_cores > 1:
        # v7x: exactly one big lane-dense tile per TensorCore.
        tb = min(B, _round_up(pl.cdiv(B, n_cores), 128))
        steps = pl.cdiv(B, tb)
        sem = (pltpu.CORE_PARALLEL,) if steps > 1 else ("arbitrary",)
        return tb, steps, sem
    # Single TC: one step whenever it fits (no per-step pipeline overhead),
    # otherwise a handful of huge lane-dense tiles with a ragged tail.
    if B <= _MAX_SINGLE_TILE:
        return B, 1, ("arbitrary",)
    return _MULTI_STEP_TILE, pl.cdiv(B, _MULTI_STEP_TILE), ("arbitrary",)


def _actor_prob_kernel(xT_ref, wpack_ref, bpack_ref, out_ref, *,
                       in_dim, hid, act_dim):
    """xT_ref:    (in_dim, TB) bf16 — batch on lanes (lane-dense feed).
    wpack_ref: (3*hid + 2*act, max(in_dim, hid)) bf16 — w1|w2|w3|wm|ws rows.
    bpack_ref: (3*hid + 2*act, 3) f32 — columns: bias | clamp_lo | clamp_hi.
    out_ref:   (2*act, TB) f32 — mean rows then log_std rows (lane-dense)."""
    cd = wpack_ref.dtype
    r1, r2, r3, rh = 0, hid, 2 * hid, 3 * hid
    two_act = 2 * act_dim

    # fc1 + relu: (hid, TB)
    h = jnp.dot(wpack_ref[r1:r1 + hid, 0:in_dim], xT_ref[...],
                preferred_element_type=jnp.float32)
    h = jnp.maximum(h + bpack_ref[r1:r1 + hid, 0:1], 0.0).astype(cd)

    # fc2 + relu
    h = jnp.dot(wpack_ref[r2:r2 + hid, 0:hid], h,
                preferred_element_type=jnp.float32)
    h = jnp.maximum(h + bpack_ref[r2:r2 + hid, 0:1], 0.0).astype(cd)

    # fc3 + relu
    h = jnp.dot(wpack_ref[r3:r3 + hid, 0:hid], h,
                preferred_element_type=jnp.float32)
    h = jnp.maximum(h + bpack_ref[r3:r3 + hid, 0:1], 0.0).astype(cd)

    # fused mean|log_std head: (2*act, TB), f32
    head = (jnp.dot(wpack_ref[rh:rh + two_act, 0:hid], h,
                    preferred_element_type=jnp.float32)
            + bpack_ref[rh:rh + two_act, 0:1])

    # Per-row clamp: mean rows have (-inf, +inf) bounds (identity),
    # log_std rows have (LOG_SIG_MIN, LOG_SIG_MAX).
    lo = bpack_ref[rh:rh + two_act, 1:2]
    hi = bpack_ref[rh:rh + two_act, 2:3]
    out_ref[...] = jnp.minimum(jnp.maximum(head, lo), hi).astype(out_ref.dtype)

    # TODO(synk): sample()/evaluation() epilogue (exp(log_std), rsample, tanh
    # squash, Normal log-prob) is not fused here; forward() contract is kept.


def prepare_params(params, compute_dtype=jnp.bfloat16):
    """params: PyTorch-layout dict with w1..w3 (out,in), b1..b3 (out,),
    wm/ws (act, hid), bm/bs (act,).  Returns (wpack, bpack):
      wpack: (3*hid + 2*act, max(in_dim, hid)) bf16, rows = w1|w2|w3|wm|ws,
             in-dim zero-padded to the common width.
      bpack: (3*hid + 2*act, 3) f32, columns = bias | clamp_lo | clamp_hi."""
    f32 = jnp.float32
    w1 = jnp.asarray(params["w1"], f32)
    w2 = jnp.asarray(params["w2"], f32)
    w3 = jnp.asarray(params["w3"], f32)
    wm = jnp.asarray(params["wm"], f32)
    ws = jnp.asarray(params["ws"], f32)
    hid, in_dim = w1.shape
    act = wm.shape[0]
    width = max(in_dim, hid)

    def pad_w(w):
        return jnp.pad(w, ((0, 0), (0, width - w.shape[1])))

    wpack = jnp.concatenate(
        [pad_w(w1), pad_w(w2), pad_w(w3), pad_w(wm), pad_w(ws)],
        axis=0).astype(compute_dtype)

    bias = jnp.concatenate(
        [jnp.asarray(params[k], f32) for k in ("b1", "b2", "b3", "bm", "bs")])
    lo = jnp.concatenate([jnp.zeros(3 * hid, f32),
                          jnp.full((act,), -jnp.inf, f32),
                          jnp.full((act,), LOG_SIG_MIN, f32)])
    hi = jnp.concatenate([jnp.zeros(3 * hid, f32),
                          jnp.full((act,), jnp.inf, f32),
                          jnp.full((act,), LOG_SIG_MAX, f32)])
    bpack = jnp.stack([bias, lo, hi], axis=1)
    return wpack, bpack


def actor_prob_forward(x, wpack, bpack, *, hid, act_dim):
    """x: (B, obs+goal) f32.  Returns (mean, log_std), each (B, act)."""
    B, in_dim = x.shape
    two_act = 2 * act_dim
    compute_dtype = wpack.dtype

    TB, steps, dim_sem = _batch_tiling(B)

    # One fused transpose+cast XLA op: lane-dense (in_dim, B) bf16 feed.
    xT = x.T.astype(compute_dtype)

    flops = 2 * B * (in_dim * hid + 2 * hid * hid + hid * two_act)
    bytes_accessed = (xT.size * 2
                      + wpack.size * wpack.dtype.itemsize
                      + bpack.size * bpack.dtype.itemsize
                      + B * two_act * 4)

    def pinned(shape):
        # Full-array block, same block index every step -> params are DMA'd
        # into VMEM once and stay resident across the batch grid.
        return pl.BlockSpec(shape, lambda i: (0, 0))

    out = pl.pallas_call(
        functools.partial(_actor_prob_kernel,
                          in_dim=in_dim, hid=hid, act_dim=act_dim),
        out_shape=jax.ShapeDtypeStruct((two_act, B), jnp.float32),
        grid=(steps,),
        in_specs=[
            pl.BlockSpec((in_dim, TB), lambda i: (0, i)),   # xT tiled over batch
            pinned(wpack.shape),
            pinned(bpack.shape),
        ],
        out_specs=pl.BlockSpec((two_act, TB), lambda i: (0, i)),
        compiler_params=pltpu.CompilerParams(dimension_semantics=dim_sem),
        cost_estimate=pl.CostEstimate(
            flops=flops, transcendentals=0, bytes_accessed=bytes_accessed),
    )(xT, wpack, bpack)

    # Single transpose back to the module's (B, .) convention, then slice views.
    out_t = out.T                       # (B, 2*act)
    return out_t[:, :act_dim], out_t[:, act_dim:]


if __name__ == "__main__":
    env_params = {"obs": 10, "goal": 3, "hidden_unit": 32,
                  "action": 4, "action_max": 1.0}
    in_dim = env_params["obs"] + env_params["goal"]
    hid = env_params["hidden_unit"]
    act = env_params["action"]

    def init_linear(key, out_dim, in_dim_):
        # PyTorch nn.Linear default init: uniform(+-1/sqrt(fan_in)).
        kw, kb = jax.random.split(key)
        bound = 1.0 / (in_dim_ ** 0.5)
        w = jax.random.uniform(kw, (out_dim, in_dim_), jnp.float32, -bound, bound)
        b = jax.random.uniform(kb, (out_dim,), jnp.float32, -bound, bound)
        return w, b

    key = jax.random.PRNGKey(0)
    k_x, k1, k2, k3, km, ks = jax.random.split(key, 6)
    w1, b1 = init_linear(k1, hid, in_dim)
    w2, b2 = init_linear(k2, hid, hid)
    w3, b3 = init_linear(k3, hid, hid)
    wm, bm = init_linear(km, act, hid)
    ws, bs = init_linear(ks, act, hid)
    raw = dict(w1=w1, b1=b1, w2=w2, b2=b2, w3=w3, b3=b3,
               wm=wm, bm=bm, ws=ws, bs=bs)

    wpack, bpack = prepare_params(raw)
    fwd = jax.jit(functools.partial(actor_prob_forward, hid=hid, act_dim=act))

    cd = wpack.dtype

    def ref_forward(x):
        # Same dtype flow as the kernel: bf16 MXU operands, f32 accumulation,
        # f32 bias/relu/clamp.
        h = x.astype(cd)
        for wn, bn in (("w1", "b1"), ("w2", "b2"), ("w3", "b3")):
            z = jnp.dot(h, raw[wn].astype(cd).T, preferred_element_type=jnp.float32)
            h = jnp.maximum(z + raw[bn][None, :], 0.0).astype(cd)
        mean = (jnp.dot(h, raw["wm"].astype(cd).T, preferred_element_type=jnp.float32)
                + raw["bm"][None, :])
        ls = (jnp.dot(h, raw["ws"].astype(cd).T, preferred_element_type=jnp.float32)
              + raw["bs"][None, :])
        return mean, jnp.clip(ls, LOG_SIG_MIN, LOG_SIG_MAX)

    # B=2: tiny single-block path.  B=1152: one big tile on 1-TC chips
    # (two CORE_PARALLEL tiles on v7x).  B=20480: multi-step path with a
    # ragged tail tile (garbage in padded columns is masked out on store).
    for B in (2, 1152, 20480):
        x = jax.random.normal(jax.random.fold_in(k_x, B), (B, in_dim), jnp.float32)
        mean, log_std = fwd(x, wpack, bpack)
        jax.block_until_ready((mean, log_std))

        m_ref, ls_ref = ref_forward(x)
        assert mean.shape == (B, act) and log_std.shape == (B, act)
        assert jnp.allclose(mean, m_ref, atol=2e-3, rtol=2e-2), \
            float(jnp.max(jnp.abs(mean - m_ref)))
        assert jnp.allclose(log_std, ls_ref, atol=2e-3, rtol=2e-2), \
            float(jnp.max(jnp.abs(log_std - ls_ref)))

    print("KERNEL_OK")
</pallas_src>

<mosaic_0001>
module attributes {stable_mosaic.version = 11 : i64} {
  func.func @_actor_prob_kernel(%arg0: i32, %arg1: memref<13x2xbf16, #tpu.memory_space<vmem>>, %arg2: memref<104x32xbf16, #tpu.memory_space<vmem>>, %arg3: memref<104x3xf32, #tpu.memory_space<vmem>>, %arg4: memref<8x2xf32, #tpu.memory_space<vmem>>) attributes {dimension_semantics = [#tpu.dimension_semantics<arbitrary>], iteration_bounds = array<i64: 1>, scalar_prefetch = 0 : i64, scratch_operands = 0 : i64, tpu.core_type = #tpu.core_type<tc>, window_params = [{transform_indices = @transform_0, window_bounds = array<i64: 13, 2>}, {pipeline_mode = #tpu.pipeline_mode<synchronous>, transform_indices = @transform_1, window_bounds = array<i64: 104, 32>}, {pipeline_mode = #tpu.pipeline_mode<synchronous>, transform_indices = @transform_2, window_bounds = array<i64: 104, 3>}, {transform_indices = @transform_3, window_bounds = array<i64: 8, 2>}]} {
    %c0 = arith.constant 0 : index
    %c0_0 = arith.constant 0 : index
    %0 = vector.load %arg2[%c0, %c0_0] : memref<104x32xbf16, #tpu.memory_space<vmem>>, vector<32x13xbf16>
    %c0_1 = arith.constant 0 : index
    %c0_2 = arith.constant 0 : index
    %1 = vector.load %arg1[%c0_1, %c0_2] : memref<13x2xbf16, #tpu.memory_space<vmem>>, vector<13x2xbf16>
    %cst = arith.constant dense<0.000000e+00> : vector<32x2xf32>
    %2 = tpu.matmul %0, %1, %cst {dimension_numbers = #tpu.dot_dimension_numbers<[1], [0], [0], [1], [0, 0, 1, 1], [], []>} : vector<32x13xbf16>, vector<13x2xbf16>, vector<32x2xf32> -> vector<32x2xf32>
    %c0_3 = arith.constant 0 : index
    %c0_4 = arith.constant 0 : index
    %3 = vector.load %arg3[%c0_3, %c0_4] : memref<104x3xf32, #tpu.memory_space<vmem>>, vector<32x1xf32>
    %4 = vector.broadcast %3 : vector<32x1xf32> to vector<32x2xf32>
    %5 = arith.addf %2, %4 : vector<32x2xf32>
    %cst_5 = arith.constant 0.000000e+00 : f32
    %6 = vector.broadcast %cst_5 : f32 to vector<32x2xf32>
    %7 = arith.maximumf %5, %6 : vector<32x2xf32>
    %8 = arith.truncf %7 : vector<32x2xf32> to vector<32x2xbf16>
    %c32 = arith.constant 32 : index
    %c0_6 = arith.constant 0 : index
    %9 = vector.load %arg2[%c32, %c0_6] : memref<104x32xbf16, #tpu.memory_space<vmem>>, vector<32x32xbf16>
    %cst_7 = arith.constant dense<0.000000e+00> : vector<32x2xf32>
    %10 = tpu.matmul %9, %8, %cst_7 {dimension_numbers = #tpu.dot_dimension_numbers<[1], [0], [0], [1], [0, 0, 1, 1], [], []>} : vector<32x32xbf16>, vector<32x2xbf16>, vector<32x2xf32> -> vector<32x2xf32>
    %c32_8 = arith.constant 32 : index
    %c0_9 = arith.constant 0 : index
    %11 = vector.load %arg3[%c32_8, %c0_9] : memref<104x3xf32, #tpu.memory_space<vmem>>, vector<32x1xf32>
    %12 = vector.broadcast %11 : vector<32x1xf32> to vector<32x2xf32>
    %13 = arith.addf %10, %12 : vector<32x2xf32>
    %cst_10 = arith.constant 0.000000e+00 : f32
    %14 = vector.broadcast %cst_10 : f32 to vector<32x2xf32>
    %15 = arith.maximumf %13, %14 : vector<32x2xf32>
    %16 = arith.truncf %15 : vector<32x2xf32> to vector<32x2xbf16>
    %c64 = arith.constant 64 : index
    %c0_11 = arith.constant 0 : index
    %17 = vector.load %arg2[%c64, %c0_11] : memref<104x32xbf16, #tpu.memory_space<vmem>>, vector<32x32xbf16>
    %cst_12 = arith.constant dense<0.000000e+00> : vector<32x2xf32>
    %18 = tpu.matmul %17, %16, %cst_12 {dimension_numbers = #tpu.dot_dimension_numbers<[1], [0], [0], [1], [0, 0, 1, 1], [], []>} : vector<32x32xbf16>, vector<32x2xbf16>, vector<32x2xf32> -> vector<32x2xf32>
    %c64_13 = arith.constant 64 : index
    %c0_14 = arith.constant 0 : index
    %19 = vector.load %arg3[%c64_13, %c0_14] : memref<104x3xf32, #tpu.memory_space<vmem>>, vector<32x1xf32>
    %20 = vector.broadcast %19 : vector<32x1xf32> to vector<32x2xf32>
    %21 = arith.addf %18, %20 : vector<32x2xf32>
    %cst_15 = arith.constant 0.000000e+00 : f32
    %22 = vector.broadcast %cst_15 : f32 to vector<32x2xf32>
    %23 = arith.maximumf %21, %22 : vector<32x2xf32>
    %24 = arith.truncf %23 : vector<32x2xf32> to vector<32x2xbf16>
    %c96 = arith.constant 96 : index
    %c0_16 = arith.constant 0 : index
    %25 = vector.load %arg2[%c96, %c0_16] : memref<104x32xbf16, #tpu.memory_space<vmem>>, vector<8x32xbf16>
    %cst_17 = arith.constant dense<0.000000e+00> : vector<8x2xf32>
    %26 = tpu.matmul %25, %24, %cst_17 {dimension_numbers = #tpu.dot_dimension_numbers<[1], [0], [0], [1], [0, 0, 1, 1], [], []>} : vector<8x32xbf16>, vector<32x2xbf16>, vector<8x2xf32> -> vector<8x2xf32>
    %c96_18 = arith.constant 96 : index
    %c0_19 = arith.constant 0 : index
    %27 = vector.load %arg3[%c96_18, %c0_19] : memref<104x3xf32, #tpu.memory_space<vmem>>, vector<8x1xf32>
    %28 = vector.broadcast %27 : vector<8x1xf32> to vector<8x2xf32>
    %29 = arith.addf %26, %28 : vector<8x2xf32>
    %c96_20 = arith.constant 96 : index
    %c1 = arith.constant 1 : index
    %30 = vector.load %arg3[%c96_20, %c1] : memref<104x3xf32, #tpu.memory_space<vmem>>, vector<8x1xf32>
    %c96_21 = arith.constant 96 : index
    %c2 = arith.constant 2 : index
    %31 = vector.load %arg3[%c96_21, %c2] : memref<104x3xf32, #tpu.memory_space<vmem>>, vector<8x1xf32>
    %32 = vector.broadcast %30 : vector<8x1xf32> to vector<8x2xf32>
    %33 = arith.maximumf %29, %32 : vector<8x2xf32>
    %34 = vector.broadcast %31 : vector<8x1xf32> to vector<8x2xf32>
    %35 = arith.minimumf %33, %34 : vector<8x2xf32>
    %c0_22 = arith.constant 0 : index
    %c0_23 = arith.constant 0 : index
    %36 = vector.load %arg4[%c0_22, %c0_23] : memref<8x2xf32, #tpu.memory_space<vmem>>, vector<8x2xf32>
    tpu.vector_store %arg4[%c0_22, %c0_23], %35 {strides = array<i32>} : memref<8x2xf32, #tpu.memory_space<vmem>>, vector<8x2xf32>,
    return
  }
  func.func @transform_0(%arg0: i32) -> (i32, i32) {
    %c0_i32 = arith.constant 0 : i32
    %c0_i32_0 = arith.constant 0 : i32
    return %c0_i32, %arg0 : i32, i32
  }
  func.func @transform_1(%arg0: i32) -> (i32, i32) {
    %c0_i32 = arith.constant 0 : i32
    %c0_i32_0 = arith.constant 0 : i32
    %c0_i32_1 = arith.constant 0 : i32
    return %c0_i32, %c0_i32_0 : i32, i32
  }
  func.func @transform_2(%arg0: i32) -> (i32, i32) {
    %c0_i32 = arith.constant 0 : i32
    %c0_i32_0 = arith.constant 0 : i32
    %c0_i32_1 = arith.constant 0 : i32
    return %c0_i32, %c0_i32_0 : i32, i32
  }
  func.func @transform_3(%arg0: i32) -> (i32, i32) {
    %c0_i32 = arith.constant 0 : i32
    %c0_i32_0 = arith.constant 0 : i32
    return %c0_i32, %arg0 : i32, i32
  }
}

</mosaic_0001>

<llo_original>
// kernel: actor_prob_forward.1
$region0: #{actor_prob_forward.1}
  #allocation0 [shape = 'u32[]', space=smem, size = 0x4, offset = 0x4, fixed_abs, tag = 'smem constant byte address 0x4 - core index']
  #allocation1 [shape = 'u32[144,128]{1,0:T(1,128)}', space=vmem, size = 0x12000, scoped, tag = 'internal scratch']
  %s0 = inlined_call_operand.vmem [shape: bf16[13,2], index: 0, kind: input, shape index: {}]
  %s1 = inlined_call_operand.vmem [shape: bf16[104,32], index: 1, kind: input, shape index: {}]
  %s2 = inlined_call_operand.vmem [shape: f32[104,3], index: 2, kind: input, shape index: {}]
  %s3 = inlined_call_operand.vmem [shape: f32[8,2], index: 3, kind: output, shape index: {}]
  %s4 = sld [smem:[#allocation0]]
  $region22: #{actor_prob_forward.1} parent=0
    _
  %s6 = ssub.s32 1, %s4
  %s7 = scalar_select 0, %s6, %s4
  // Predicated region
  $region2: #{actor_prob_forward.1} parent=0 // pred_check
    _
  $region3: #{actor_prob_forward.1} parent=0 // pred_check_branch
    %9 = sbr.rel (0) target = $region5
  $region4: #{actor_prob_forward.1} parent=0 // pred_region
    _
  $region5: #{actor_prob_forward.1} parent=0 // pred_fallthru
    _
  // Predicated region
  $region6: #{actor_prob_forward.1} parent=0 // pred_check
    _
  $region7: #{actor_prob_forward.1} parent=0 // pred_check_branch
    %11 = sbr.rel (0) target = $region9
  $region8: #{actor_prob_forward.1} parent=0 // pred_region
    _
  $region9: #{actor_prob_forward.1} parent=0 // pred_fallthru
    _
  // Predicated region
  $region10: #{actor_prob_forward.1} parent=0 // pred_check
    _
  $region11: #{actor_prob_forward.1} parent=0 // pred_check_branch
    %13 = sbr.rel (0) target = $region13
  $region12: #{actor_prob_forward.1} parent=0 // pred_region
    _
  $region13: #{actor_prob_forward.1} parent=0 // pred_fallthru
    _
  %v15 = vld [vmem:[%s1] sm:$0xf]
  %v16 = vld [vmem:[%s1 + $0x4] sm:$0xf]
  %v17 = vld [vmem:[%s1 + $0x8] sm:$0xf]
  %v18 = vld [vmem:[%s1 + $0xc] sm:$0xf]
  %v19 = vld [vmem:[%s0] sm:$0xf]
  %v20 = vld [vmem:[%s0 + $0x4] sm:$0x7]
  %v21 = vld [vmem:[%s2] sm:$0xff]
  %v22 = vld [vmem:[%s2 + $0x8] sm:$0xff]
  %v23 = vld [vmem:[%s2 + $0x10] sm:$0xff]
  %v24 = vld [vmem:[%s2 + $0x18] sm:$0xff]
  %26 = vset.pattern.permute.xlu0 0
  %27 = vperm.xlu0 %26, %v21
  %v28 = vpop.permute.xlu0 %27
  %31 = vset.pattern.permute.xlu0 0
  %32 = vperm.xlu0 %31, %v22
  %v33 = vpop.permute.xlu0 %32
  %36 = vset.pattern.permute.xlu0 0
  %37 = vperm.xlu0 %36, %v23
  %v38 = vpop.permute.xlu0 %37
  %41 = vset.pattern.permute.xlu0 0
  %42 = vperm.xlu0 %41, %v24
  %v43 = vpop.permute.xlu0 %42
  %v49 = vunpack.c.l.b16 %v15
  %v50 = vunpack.c.l.b16 %v16
  %v51 = vunpack.c.l.b16 %v17
  %v52 = vunpack.c.l.b16 %v18
  %v53 = vpack.c.b16 %v50, %v49
  %v54 = vpack.c.b16 %v52, %v51
  %v57 = vunpack.c.l.b16 %v19
  %v58 = vunpack.c.l.b16 %v20
  %v59 = vpack.c.b16 %v58, %v57
  %vm60 = vcmask 105472
  %v62 = vsel %vm60, %v53, 0
  %v65 = vsel %vm60, %v54, 0
  %vm67 = vcmask 1045504
  %vm68 = vcmask 1046528
  %v69 = vsel %vm67, 4294967295, 65535
  %v70 = vsel %vm68, %v69, 0
  %v72 = vand.u32 %v59, %v70
  %74 = vmatprep.subr.bf16.mxu0 0
  %75 = vmatpush1.bf16.msra.mxu0 %v72
  %76 = vmatprep.subr.bf16.mxu0 0
  %77 = vmatpush1.bf16.msra.mxu0 0
  %78 = vmatprep.subr.bf16.mxu0 0
  %79 = vmatpush1.bf16.msra.mxu0 0
  %80 = vmatprep.subr.bf16.mxu0 0
  %81 = vmatpush1.bf16.msra.mxu0 0
  %82 = vmatprep.subr.bf16.mxu0 0
  %83 = vmatpush1.bf16.msra.mxu0 0
  %84 = vmatprep.subr.bf16.mxu0 0
  %85 = vmatpush1.bf16.msra.mxu0 0
  %86 = vmatprep.subr.bf16.mxu0 0
  %87 = vmatpush1.bf16.msra.mxu0 0
  %88 = vmatprep.subr.bf16.mxu0 0
  %89 = vmatpush1.bf16.msra.mxu0 0
  %90 = vmatprep.subr.bf16.mxu0 0
  %91 = vmatpush1.bf16.msra.mxu0 0
  %92 = vmatprep.subr.bf16.mxu0 0
  %93 = vmatpush1.bf16.msra.mxu0 0
  %94 = vmatprep.subr.bf16.mxu0 0
  %95 = vmatpush1.bf16.msra.mxu0 0
  %96 = vmatprep.subr.bf16.mxu0 0
  %97 = vmatpush1.bf16.msra.mxu0 0
  %98 = vmatprep.subr.bf16.mxu0 0
  %99 = vmatpush1.bf16.msra.mxu0 0
  %100 = vmatprep.subr.bf16.mxu0 0
  %101 = vmatpush1.bf16.msra.mxu0 0
  %102 = vmatprep.subr.bf16.mxu0 0
  %103 = vmatpush1.bf16.msra.mxu0 0
  %104 = vmatprep.subr.bf16.mxu0 0
  %105 = vmatpush1.bf16.msra.mxu0 0
  %106 = vmatprep.mubr.bf16.mxu0 0
  %107 = vmatmul.mubr.bf16.gmra.mrb[0].mxu0 %v62
  %v108 = vpop.f32.mrb[0].mxu0
  %v109 = vadd.f32 %v28, %v108
  %v110 = vpop.f32.mrb[0].mxu0
  %v111 = vpop.f32.mrb[0].mxu0
  %v112 = vadd.f32 %v33, %v111
  %v113 = vpop.f32.mrb[0].mxu0
  %114 = vmatprep.mubr.bf16.mxu0 0
  %115 = vmatmul.mubr.bf16.gmra.mrb[0].mxu0 %v65
  %v116 = vpop.f32.mrb[0].mxu0
  %v117 = vadd.f32 %v38, %v116
  %v118 = vpop.f32.mrb[0].mxu0
  %v119 = vpop.f32.mrb[0].mxu0
  %v120 = vadd.f32 %v43, %v119
  %v121 = vpop.f32.mrb[0].mxu0
  %122 = vdwg.mxu0
  %v123 = vmax.f32 %v109, 0.0
  %v124 = vmax.f32 %v112, 0.0
  %v125 = vmax.f32 %v117, 0.0
  %v126 = vmax.f32 %v120, 0.0
  %v127 = vpack.c.bf16 %v124, %v123
  %v128 = vpack.c.bf16 %v126, %v125
  %v129 = vld [vmem:[%s1 + $0x10] sm:$0xf]
  %v130 = vld [vmem:[%s1 + $0x14] sm:$0xf]
  %v131 = vld [vmem:[%s1 + $0x18] sm:$0xf]
  %v132 = vld [vmem:[%s1 + $0x1c] sm:$0xf]
  %v133 = vld [vmem:[%s2 + $0x20] sm:$0xff]
  %v134 = vld [vmem:[%s2 + $0x28] sm:$0xff]
  %v135 = vld [vmem:[%s2 + $0x30] sm:$0xff]
  %v136 = vld [vmem:[%s2 + $0x38] sm:$0xff]
  %138 = vset.pattern.permute.xlu0 0
  %139 = vperm.xlu0 %138, %v133
  %v140 = vpop.permute.xlu0 %139
  %143 = vset.pattern.permute.xlu0 0
  %144 = vperm.xlu0 %143, %v134
  %v145 = vpop.permute.xlu0 %144
  %148 = vset.pattern.permute.xlu0 0
  %149 = vperm.xlu0 %148, %v135
  %v150 = vpop.permute.xlu0 %149
  %153 = vset.pattern.permute.xlu0 0
  %154 = vperm.xlu0 %153, %v136
  %v155 = vpop.permute.xlu0 %154
  %v161 = vunpack.c.l.b16 %v129
  %v162 = vunpack.c.l.b16 %v130
  %v163 = vunpack.c.l.b16 %v131
  %v164 = vunpack.c.l.b16 %v132
  %v165 = vpack.c.b16 %v162, %v161
  %v166 = vpack.c.b16 %v164, %v163
  %vm167 = vcmask 261120
  %v169 = vsel %vm167, %v165, 0
  %v172 = vsel %vm167, %v166, 0
  %174 = vmatprep.subr.bf16.mxu0 0
  %175 = vmatpush1.bf16.msra.mxu0 %v127
  %176 = vmatprep.subr.bf16.mxu0 0
  %177 = vmatpush1.bf16.msra.mxu0 %v128
  %178 = vmatprep.subr.bf16.mxu0 0
  %179 = vmatpush1.bf16.msra.mxu0 0
  %180 = vmatprep.subr.bf16.mxu0 0
  %181 = vmatpush1.bf16.msra.mxu0 0
  %182 = vmatprep.subr.bf16.mxu0 0
  %183 = vmatpush1.bf16.msra.mxu0 0
  %184 = vmatprep.subr.bf16.mxu0 0
  %185 = vmatpush1.bf16.msra.mxu0 0
  %186 = vmatprep.subr.bf16.mxu0 0
  %187 = vmatpush1.bf16.msra.mxu0 0
  %188 = vmatprep.subr.bf16.mxu0 0
  %189 = vmatpush1.bf16.msra.mxu0 0
  %190 = vmatprep.subr.bf16.mxu0 0
  %191 = vmatpush1.bf16.msra.mxu0 0
  %192 = vmatprep.subr.bf16.mxu0 0
  %193 = vmatpush1.bf16.msra.mxu0 0
  %194 = vmatprep.subr.bf16.mxu0 0
  %195 = vmatpush1.bf16.msra.mxu0 0
  %196 = vmatprep.subr.bf16.mxu0 0
  %197 = vmatpush1.bf16.msra.mxu0 0
  %198 = vmatprep.subr.bf16.mxu0 0
  %199 = vmatpush1.bf16.msra.mxu0 0
  %200 = vmatprep.subr.bf16.mxu0 0
  %201 = vmatpush1.bf16.msra.mxu0 0
  %202 = vmatprep.subr.bf16.mxu0 0
  %203 = vmatpush1.bf16.msra.mxu0 0
  %204 = vmatprep.subr.bf16.mxu0 0
  %205 = vmatpush1.bf16.msra.mxu0 0
  %206 = vmatprep.mubr.bf16.mxu0 0
  %207 = vmatmul.mubr.bf16.gmra.mrb[0].mxu0 %v169
  %v208 = vpop.f32.mrb[0].mxu0
  %v209 = vadd.f32 %v140, %v208
  %v210 = vpop.f32.mrb[0].mxu0
  %v211 = vpop.f32.mrb[0].mxu0
  %v212 = vadd.f32 %v145, %v211
  %v213 = vpop.f32.mrb[0].mxu0
  %214 = vmatprep.mubr.bf16.mxu0 0
  %215 = vmatmul.mubr.bf16.gmra.mrb[0].mxu0 %v172
  %v216 = vpop.f32.mrb[0].mxu0
  %v217 = vadd.f32 %v150, %v216
  %v218 = vpop.f32.mrb[0].mxu0
  %v219 = vpop.f32.mrb[0].mxu0
  %v220 = vadd.f32 %v155, %v219
  %v221 = vpop.f32.mrb[0].mxu0
  %222 = vdwg.mxu0
  %v223 = vmax.f32 %v209, 0.0
  %v224 = vmax.f32 %v212, 0.0
  %v225 = vmax.f32 %v217, 0.0
  %v226 = vmax.f32 %v220, 0.0
  %v227 = vpack.c.bf16 %v224, %v223
  %v228 = vpack.c.bf16 %v226, %v225
  %v229 = vld [vmem:[%s1 + $0x20] sm:$0xf]
  %v230 = vld [vmem:[%s1 + $0x24] sm:$0xf]
  %v231 = vld [vmem:[%s1 + $0x28] sm:$0xf]
  %v232 = vld [vmem:[%s1 + $0x2c] sm:$0xf]
  %v233 = vld [vmem:[%s2 + $0x40] sm:$0xff]
  %v234 = vld [vmem:[%s2 + $0x48] sm:$0xff]
  %v235 = vld [vmem:[%s2 + $0x50] sm:$0xff]
  %v236 = vld [vmem:[%s2 + $0x58] sm:$0xff]
  %238 = vset.pattern.permute.xlu0 0
  %239 = vperm.xlu0 %238, %v233
  %v240 = vpop.permute.xlu0 %239
  %243 = vset.pattern.permute.xlu0 0
  %244 = vperm.xlu0 %243, %v234
  %v245 = vpop.permute.xlu0 %244
  %248 = vset.pattern.permute.xlu0 0
  %249 = vperm.xlu0 %248, %v235
  %v250 = vpop.permute.xlu0 %249
  %253 = vset.pattern.permute.xlu0 0
  %254 = vperm.xlu0 %253, %v236
  %v255 = vpop.permute.xlu0 %254
  %v261 = vunpack.c.l.b16 %v229
  %v262 = vunpack.c.l.b16 %v230
  %v263 = vunpack.c.l.b16 %v231
  %v264 = vunpack.c.l.b16 %v232
  %v265 = vpack.c.b16 %v262, %v261
  %v266 = vpack.c.b16 %v264, %v263
  %v268 = vsel %vm167, %v265, 0
  %v271 = vsel %vm167, %v266, 0
  %273 = vmatprep.subr.bf16.mxu0 0
  %274 = vmatpush1.bf16.msra.mxu0 %v227
  %275 = vmatprep.subr.bf16.mxu0 0
  %276 = vmatpush1.bf16.msra.mxu0 %v228
  %277 = vmatprep.subr.bf16.mxu0 0
  %278 = vmatpush1.bf16.msra.mxu0 0
  %279 = vmatprep.subr.bf16.mxu0 0
  %280 = vmatpush1.bf16.msra.mxu0 0
  %281 = vmatprep.subr.bf16.mxu0 0
  %282 = vmatpush1.bf16.msra.mxu0 0
  %283 = vmatprep.subr.bf16.mxu0 0
  %284 = vmatpush1.bf16.msra.mxu0 0
  %285 = vmatprep.subr.bf16.mxu0 0
  %286 = vmatpush1.bf16.msra.mxu0 0
  %287 = vmatprep.subr.bf16.mxu0 0
  %288 = vmatpush1.bf16.msra.mxu0 0
  %289 = vmatprep.subr.bf16.mxu0 0
  %290 = vmatpush1.bf16.msra.mxu0 0
  %291 = vmatprep.subr.bf16.mxu0 0
  %292 = vmatpush1.bf16.msra.mxu0 0
  %293 = vmatprep.subr.bf16.mxu0 0
  %294 = vmatpush1.bf16.msra.mxu0 0
  %295 = vmatprep.subr.bf16.mxu0 0
  %296 = vmatpush1.bf16.msra.mxu0 0
  %297 = vmatprep.subr.bf16.mxu0 0
  %298 = vmatpush1.bf16.msra.mxu0 0
  %299 = vmatprep.subr.bf16.mxu0 0
  %300 = vmatpush1.bf16.msra.mxu0 0
  %301 = vmatprep.subr.bf16.mxu0 0
  %302 = vmatpush1.bf16.msra.mxu0 0
  %303 = vmatprep.subr.bf16.mxu0 0
  %304 = vmatpush1.bf16.msra.mxu0 0
  %305 = vmatprep.mubr.bf16.mxu0 0
  %306 = vmatmul.mubr.bf16.gmra.mrb[0].mxu0 %v268
  %v307 = vpop.f32.mrb[0].mxu0
  %v308 = vadd.f32 %v240, %v307
  %v309 = vpop.f32.mrb[0].mxu0
  %v310 = vpop.f32.mrb[0].mxu0
  %v311 = vadd.f32 %v245, %v310
  %v312 = vpop.f32.mrb[0].mxu0
  %313 = vmatprep.mubr.bf16.mxu0 0
  %314 = vmatmul.mubr.bf16.gmra.mrb[0].mxu0 %v271
  %v315 = vpop.f32.mrb[0].mxu0
  %v316 = vadd.f32 %v250, %v315
  %v317 = vpop.f32.mrb[0].mxu0
  %v318 = vpop.f32.mrb[0].mxu0
  %v319 = vadd.f32 %v255, %v318
  %v320 = vpop.f32.mrb[0].mxu0
  %321 = vdwg.mxu0
  %v322 = vmax.f32 %v308, 0.0
  %v323 = vmax.f32 %v311, 0.0
  %v324 = vmax.f32 %v316, 0.0
  %v325 = vmax.f32 %v319, 0.0
  %v326 = vpack.c.bf16 %v323, %v322
  %v327 = vpack.c.bf16 %v325, %v324
  %v328 = vld [vmem:[%s1 + $0x30] sm:$0xf]
  %v329 = vld [vmem:[%s2 + $0x60] sm:$0xff]
  %331 = vset.pattern.permute.xlu0 0
  %332 = vperm.xlu0 %331, %v329
  %v333 = vpop.permute.xlu0 %332
  %v336 = vsel %vm167, %v328, 0
  %338 = vmatprep.subr.bf16.mxu0 0
  %339 = vmatpush1.bf16.msra.mxu0 %v326
  %340 = vmatprep.subr.bf16.mxu0 0
  %341 = vmatpush1.bf16.msra.mxu0 %v327
  %342 = vmatprep.subr.bf16.mxu0 0
  %343 = vmatpush1.bf16.msra.mxu0 0
  %344 = vmatprep.subr.bf16.mxu0 0
  %345 = vmatpush1.bf16.msra.mxu0 0
  %346 = vmatprep.subr.bf16.mxu0 0
  %347 = vmatpush1.bf16.msra.mxu0 0
  %348 = vmatprep.subr.bf16.mxu0 0
  %349 = vmatpush1.bf16.msra.mxu0 0
  %350 = vmatprep.subr.bf16.mxu0 0
  %351 = vmatpush1.bf16.msra.mxu0 0
  %352 = vmatprep.subr.bf16.mxu0 0
  %353 = vmatpush1.bf16.msra.mxu0 0
  %354 = vmatprep.subr.bf16.mxu0 0
  %355 = vmatpush1.bf16.msra.mxu0 0
  %356 = vmatprep.subr.bf16.mxu0 0
  %357 = vmatpush1.bf16.msra.mxu0 0
  %358 = vmatprep.subr.bf16.mxu0 0
  %359 = vmatpush1.bf16.msra.mxu0 0
  %360 = vmatprep.subr.bf16.mxu0 0
  %361 = vmatpush1.bf16.msra.mxu0 0
  %362 = vmatprep.subr.bf16.mxu0 0
  %363 = vmatpush1.bf16.msra.mxu0 0
  %364 = vmatprep.subr.bf16.mxu0 0
  %365 = vmatpush1.bf16.msra.mxu0 0
  %366 = vmatprep.subr.bf16.mxu0 0
  %367 = vmatpush1.bf16.msra.mxu0 0
  %368 = vmatprep.subr.bf16.mxu0 0
  %369 = vmatpush1.bf16.msra.mxu0 0
  %370 = vmatprep.mubr.bf16.mxu0 0
  %371 = vmatmul.mubr.bf16.gmra.mrb[0].mxu0 %v336
  %v372 = vpop.f32.mrb[0].mxu0
  %v373 = vadd.f32 %v333, %v372
  %v374 = vpop.f32.mrb[0].mxu0
  %v375 = vpop.f32.mrb[0].mxu0
  %v376 = vpop.f32.mrb[0].mxu0
  %377 = vdwg.mxu0
  %378 = vset.pattern.permute.xlu0 1
  %379 = vperm.xlu0 %378, %v329
  %v380 = vpop.permute.xlu0 %379
  %v382 = vmax.f32 %v373, %v380
  %383 = vset.pattern.permute.xlu0 2
  %384 = vperm.xlu0 %383, %v329
  %v385 = vpop.permute.xlu0 %384
  %v387 = vmin.f32 %v382, %v385
  %vm388 = vcmask 15360
  %389 = vst.msk [vmem:[%s3] sm:$0xff] %vm388, %v387
  // Predicated region
  $region14: #{actor_prob_forward.1} parent=0 // pred_check
    _
  $region15: #{actor_prob_forward.1} parent=0 // pred_check_branch
    %391 = sbr.rel (0) target = $region17
  $region16: #{actor_prob_forward.1} parent=0 // pred_region
    _
  $region17: #{actor_prob_forward.1} parent=0 // pred_fallthru
    _
  // Predicated region
  $region18: #{actor_prob_forward.1} parent=0 // pred_check
    _
  $region19: #{actor_prob_forward.1} parent=0 // pred_check_branch
    %393 = sbr.rel (0) target = $region21
  $region20: #{actor_prob_forward.1} parent=0 // pred_region
    _
  $region21: #{actor_prob_forward.1} parent=0 // pred_fallthru
    _

</llo_original>
